<compile_context>
chip_gen: v5e
topology: v5e:2x2
jax: 0.10.0
libtpu: 0.0.40
codegen_flags: <defaults>
</compile_context>

<pallas_src>
import jax
import jax.numpy as jnp
from jax import lax
from jax.experimental import pallas as pl
from jax.experimental.pallas import tpu as pltpu

ALPHA = 0.3
GAMMA = 2.0  # kernel specializes gamma == 2 as an explicit square

_VMEM_TILE_BUDGET = 8 * 1024 * 1024  # bytes for the double-buffered input tiles


def _pick_block_rows(B, D, in_itemsize):
    """Largest row-tile (multiple of 16, <=4096) whose pipelined footprint fits budget."""
    # 2 inputs * 2 pipeline buffers * itemsize (accumulator is now only (1, D)).
    bytes_per_row = D * 4 * in_itemsize
    tm = _VMEM_TILE_BUDGET // max(bytes_per_row, 1)
    tm = int(max(16, min(4096, (tm // 16) * 16)))
    # A single full-array block is always layout-legal when B fits in one tile.
    return B if B <= tm else tm


def _make_kernel(B, TM, D, spc, alpha, n_elems):
    # Plain Python scalars only -> baked in as literals, nothing captured.
    scale = float(alpha) / float(n_elems)

    def kernel(logits_ref, targets_ref, out_ref, acc_ref):
        c = pl.program_id(0)          # parallel chunk (megacore axis)
        i = pl.program_id(1)          # reduction step within chunk
        t = c * spc + i               # global tile index (un-clamped)

        @pl.when(i == 0)
        def _init():
            acc_ref[...] = jnp.zeros_like(acc_ref)

        x = logits_ref[...].astype(jnp.float32)
        tt = targets_ref[...].astype(jnp.float32)

        # Numerically-stable BCE-with-logits (reduction='none'):
        #   bce = max(x, 0) - x*t + log1p(exp(-|x|))
        e = jnp.exp(-jnp.abs(x))
        bce = jnp.maximum(x, 0.0) - x * tt + jnp.log1p(e)

        # Focal weighting (gamma == 2 -> square; alpha & 1/n applied at finalize).
        p_t = jnp.exp(-bce)
        w = 1.0 - p_t
        focal = (w * w) * bce

        tile_end = (t + 1) * TM  # traced scalar

        @pl.when(tile_end <= B)
        def _accum_full():
            # Full, in-bounds tile: pure sublane reduce into the (1, D) partial.
            acc_ref[...] += jnp.sum(focal, axis=0, keepdims=True)

        @pl.when(tile_end > B)
        def _accum_masked():
            # Boundary tile (and any clamped duplicate tile past NT): mask rows >= B.
            rows = t * TM + lax.broadcasted_iota(jnp.int32, (TM, D), 0)
            masked = jnp.where(rows < B, focal, 0.0)
            acc_ref[...] += jnp.sum(masked, axis=0, keepdims=True)

        @pl.when(i == pl.num_programs(1) - 1)
        def _finalize():
            partial = jnp.sum(acc_ref[...]) * scale
            out_ref[...] = jnp.full(out_ref.shape, partial, dtype=jnp.float32)

    return kernel


def focal_loss(logits: jax.Array, targets: jax.Array, *, block_rows=None) -> jax.Array:
    """Scalar focal loss, identical semantics to the PyTorch FocalLoss module."""
    assert logits.shape == targets.shape and logits.ndim == 2
    B, D = logits.shape
    itemsize = jnp.dtype(logits.dtype).itemsize

    if block_rows is None:
        block_rows = _pick_block_rows(B, D, itemsize)
    TM = int(block_rows)
    if TM >= B:
        TM = B  # single tile covering the full array (always layout-legal)
    else:
        mult = 16 if itemsize == 2 else 8
        assert TM % mult == 0, f"row tile must be a multiple of {mult} when tiling"

    NT = pl.cdiv(B, TM)                 # total number of row tiles
    NC = 2 if NT >= 2 else 1            # leading parallel chunks (2 TCs on v7x)
    spc = pl.cdiv(NT, NC)               # reduction steps per chunk
    n_elems = B * D

    kernel = _make_kernel(B=B, TM=TM, D=D, spc=spc, alpha=ALPHA, n_elems=n_elems)

    def in_map(c, i):
        # Clamp so duplicate steps of a ragged last chunk stay in bounds;
        # their rows are >= B so the kernel's mask zeroes them out.
        return (jnp.minimum(c * spc + i, NT - 1), 0)

    out = pl.pallas_call(
        kernel,
        out_shape=jax.ShapeDtypeStruct((NC, 8, 128), jnp.float32),
        grid_spec=pltpu.PrefetchScalarGridSpec(
            num_scalar_prefetch=0,
            grid=(NC, spc),
            in_specs=[
                pl.BlockSpec((TM, D), in_map),
                pl.BlockSpec((TM, D), in_map),
            ],
            out_specs=pl.BlockSpec((1, 8, 128), lambda c, i: (c, 0, 0)),
            scratch_shapes=[pltpu.VMEM((1, D), jnp.float32)],
        ),
        compiler_params=pltpu.CompilerParams(
            # Leading axis shards across TensorCores (v7x); inner axis carries
            # the accumulator -> reduction axis.
            dimension_semantics=("parallel", "arbitrary"),
        ),
    )(logits, targets)

    # Each chunk wrote its (already alpha/n-scaled) partial broadcast into its
    # own (1, 8, 128) block; sum one representative element per chunk.
    return jnp.sum(out[:, 0, 0])


def focal_loss_ref(logits, targets):
    """Pure-JAX reference (matches the PyTorch module)."""
    x = logits.astype(jnp.float32)
    t = targets.astype(jnp.float32)
    bce = jnp.maximum(x, 0.0) - x * t + jnp.log1p(jnp.exp(-jnp.abs(x)))
    p_t = jnp.exp(-bce)
    focal = ALPHA * (1.0 - p_t) ** GAMMA * bce
    return jnp.mean(focal)


if __name__ == "__main__":
    key = jax.random.PRNGKey(0)
    k_logits, k_targets = jax.random.split(key)

    # Case 1: multi-tile path, 2 parallel chunks, masked (partial) last tile.
    B, D = 200, 128
    logits = jax.random.normal(k_logits, (B, D), dtype=jnp.float32)
    targets = (jax.random.uniform(k_targets, (B, D)) > 0.5).astype(jnp.float32)
    loss = jax.block_until_ready(focal_loss(logits, targets, block_rows=64))
    ref = jax.block_until_ready(focal_loss_ref(logits, targets))
    assert jnp.allclose(loss, ref, rtol=1e-5, atol=1e-6), (loss, ref)

    # Case 2: single-tile (auto block size) path, soft targets.
    B2, D2 = 24, 256
    logits2 = jax.random.normal(k_targets, (B2, D2), dtype=jnp.float32)
    targets2 = jax.random.uniform(k_logits, (B2, D2), dtype=jnp.float32)
    loss2 = jax.block_until_ready(focal_loss(logits2, targets2))
    ref2 = jax.block_until_ready(focal_loss_ref(logits2, targets2))
    assert jnp.allclose(loss2, ref2, rtol=1e-5, atol=1e-6), (loss2, ref2)

    print("KERNEL_OK")
</pallas_src>

<mosaic_0001>
module attributes {stable_mosaic.version = 11 : i64} {
  func.func @kernel(%arg0: i32, %arg1: i32, %arg2: memref<64x128xf32, #tpu.memory_space<vmem>>, %arg3: memref<64x128xf32, #tpu.memory_space<vmem>>, %arg4: memref<1x8x128xf32, #tpu.memory_space<vmem>>, %arg5: memref<1x128xf32, #tpu.memory_space<vmem>>) attributes {dimension_semantics = [#tpu.dimension_semantics<parallel>, #tpu.dimension_semantics<arbitrary>], iteration_bounds = array<i64: 2, 2>, scalar_prefetch = 0 : i64, scratch_operands = 1 : i64, tpu.core_type = #tpu.core_type<tc>, window_params = [{transform_indices = @transform_0, window_bounds = array<i64: 64, 128>}, {transform_indices = @transform_1, window_bounds = array<i64: 64, 128>}, {transform_indices = @transform_2, window_bounds = array<i64: 1, 8, 128>}]} {
    %c2_i32 = arith.constant 2 : i32
    %0 = arith.muli %arg0, %c2_i32 : i32
    %1 = arith.addi %0, %arg1 : i32
    %c0_i32 = arith.constant 0 : i32
    %2 = arith.cmpi eq, %arg1, %c0_i32 : i32
    %3 = arith.extui %2 : i1 to i32
    %c0_i32_0 = arith.constant 0 : i32
    %4 = arith.cmpi ne, %3, %c0_i32_0 : i32
    scf.if %4 {
      %cst_12 = arith.constant 0.000000e+00 : f32
      %35 = vector.broadcast %cst_12 : f32 to vector<1x128xf32>
      %c0_13 = arith.constant 0 : index
      %c0_14 = arith.constant 0 : index
      %36 = vector.load %arg5[%c0_13, %c0_14] : memref<1x128xf32, #tpu.memory_space<vmem>>, vector<1x128xf32>
      tpu.vector_store %arg5[%c0_13, %c0_14], %35 {strides = array<i32>} : memref<1x128xf32, #tpu.memory_space<vmem>>, vector<1x128xf32>,
    } else {
    }
    %c0 = arith.constant 0 : index
    %c0_1 = arith.constant 0 : index
    %5 = vector.load %arg2[%c0, %c0_1] : memref<64x128xf32, #tpu.memory_space<vmem>>, vector<64x128xf32>
    %c0_2 = arith.constant 0 : index
    %c0_3 = arith.constant 0 : index
    %6 = vector.load %arg3[%c0_2, %c0_3] : memref<64x128xf32, #tpu.memory_space<vmem>>, vector<64x128xf32>
    %7 = math.absf %5 : vector<64x128xf32>
    %cst = arith.constant 0.000000e+00 : f32
    %8 = vector.broadcast %cst : f32 to vector<64x128xf32>
    %9 = arith.subf %8, %7 : vector<64x128xf32>
    %10 = math.exp %9 : vector<64x128xf32>
    %cst_4 = arith.constant 0.000000e+00 : f32
    %11 = vector.broadcast %cst_4 : f32 to vector<64x128xf32>
    %12 = arith.maximumf %5, %11 : vector<64x128xf32>
    %13 = arith.mulf %5, %6 : vector<64x128xf32>
    %14 = arith.subf %12, %13 : vector<64x128xf32>
    %15 = math.log1p %10 : vector<64x128xf32>
    %16 = arith.addf %14, %15 : vector<64x128xf32>
    %cst_5 = arith.constant 0.000000e+00 : f32
    %17 = vector.broadcast %cst_5 : f32 to vector<64x128xf32>
    %18 = arith.subf %17, %16 : vector<64x128xf32>
    %19 = math.exp %18 : vector<64x128xf32>
    %cst_6 = arith.constant 1.000000e+00 : f32
    %20 = vector.broadcast %cst_6 : f32 to vector<64x128xf32>
    %21 = arith.subf %20, %19 : vector<64x128xf32>
    %22 = arith.mulf %21, %21 : vector<64x128xf32>
    %23 = arith.mulf %22, %16 : vector<64x128xf32>
    %c1_i32 = arith.constant 1 : i32
    %24 = arith.addi %1, %c1_i32 : i32
    %c64_i32 = arith.constant 64 : i32
    %25 = arith.muli %24, %c64_i32 : i32
    %c200_i32 = arith.constant 200 : i32
    %26 = arith.cmpi sle, %25, %c200_i32 : i32
    %27 = arith.extui %26 : i1 to i32
    %c0_i32_7 = arith.constant 0 : i32
    %28 = arith.cmpi ne, %27, %c0_i32_7 : i32
    scf.if %28 {
      %c0_12 = arith.constant 0 : index
      %c0_13 = arith.constant 0 : index
      %35 = vector.load %arg5[%c0_12, %c0_13] : memref<1x128xf32, #tpu.memory_space<vmem>>, vector<1x128xf32>
      %cst_14 = arith.constant dense<0.000000e+00> : vector<128xf32>
      %36 = vector.multi_reduction <add>, %23, %cst_14 [0] : vector<64x128xf32> to vector<128xf32>
      %37 = vector.shape_cast %36 : vector<128xf32> to vector<1x128xf32>
      %38 = arith.addf %35, %37 : vector<1x128xf32>
      %c0_15 = arith.constant 0 : index
      %c0_16 = arith.constant 0 : index
      %39 = vector.load %arg5[%c0_15, %c0_16] : memref<1x128xf32, #tpu.memory_space<vmem>>, vector<1x128xf32>
      tpu.vector_store %arg5[%c0_15, %c0_16], %38 {strides = array<i32>} : memref<1x128xf32, #tpu.memory_space<vmem>>, vector<1x128xf32>,
    } else {
    }
    %c200_i32_8 = arith.constant 200 : i32
    %29 = arith.cmpi sgt, %25, %c200_i32_8 : i32
    %30 = arith.extui %29 : i1 to i32
    %c0_i32_9 = arith.constant 0 : i32
    %31 = arith.cmpi ne, %30, %c0_i32_9 : i32
    scf.if %31 {
      %c64_i32_12 = arith.constant 64 : i32
      %35 = arith.muli %1, %c64_i32_12 : i32
      %36 = tpu.iota {dimensions = array<i32: 0>} : vector<64x128xi32>
      %37 = vector.broadcast %35 : i32 to vector<64x128xi32>
      %38 = arith.addi %37, %36 : vector<64x128xi32>
      %c200_i32_13 = arith.constant 200 : i32
      %39 = vector.broadcast %c200_i32_13 : i32 to vector<64x128xi32>
      %40 = arith.cmpi slt, %38, %39 : vector<64x128xi32>
      %cst_14 = arith.constant 0.000000e+00 : f32
      %41 = vector.broadcast %cst_14 : f32 to vector<64x128xf32>
      %42 = arith.select %40, %23, %41 : vector<64x128xi1>, vector<64x128xf32>
      %c0_15 = arith.constant 0 : index
      %c0_16 = arith.constant 0 : index
      %43 = vector.load %arg5[%c0_15, %c0_16] : memref<1x128xf32, #tpu.memory_space<vmem>>, vector<1x128xf32>
      %cst_17 = arith.constant dense<0.000000e+00> : vector<128xf32>
      %44 = vector.multi_reduction <add>, %42, %cst_17 [0] : vector<64x128xf32> to vector<128xf32>
      %45 = vector.shape_cast %44 : vector<128xf32> to vector<1x128xf32>
      %46 = arith.addf %43, %45 : vector<1x128xf32>
      %c0_18 = arith.constant 0 : index
      %c0_19 = arith.constant 0 : index
      %47 = vector.load %arg5[%c0_18, %c0_19] : memref<1x128xf32, #tpu.memory_space<vmem>>, vector<1x128xf32>
      tpu.vector_store %arg5[%c0_18, %c0_19], %46 {strides = array<i32>} : memref<1x128xf32, #tpu.memory_space<vmem>>, vector<1x128xf32>,
    } else {
    }
    %c1_i32_10 = arith.constant 1 : i32
    %32 = arith.cmpi eq, %arg1, %c1_i32_10 : i32
    %33 = arith.extui %32 : i1 to i32
    %c0_i32_11 = arith.constant 0 : i32
    %34 = arith.cmpi ne, %33, %c0_i32_11 : i32
    scf.if %34 {
      %c0_12 = arith.constant 0 : index
      %c0_13 = arith.constant 0 : index
      %35 = vector.load %arg5[%c0_12, %c0_13] : memref<1x128xf32, #tpu.memory_space<vmem>>, vector<1x128xf32>
      %36 = vector.shape_cast %35 : vector<1x128xf32> to vector<1x1x128xf32>
      %cst_14 = arith.constant dense<0.000000e+00> : vector<1xf32>
      %37 = vector.multi_reduction <add>, %36, %cst_14 [1, 2] : vector<1x1x128xf32> to vector<1xf32>
      %38 = vector.shape_cast %37 : vector<1xf32> to vector<1x1x1xf32>
      %39 = vector.extract %38[0, 0, 0] : f32 from vector<1x1x1xf32>
      %cst_15 = arith.constant 1.17187501E-5 : f32
      %40 = arith.mulf %39, %cst_15 : f32
      %41 = vector.broadcast %40 : f32 to vector<1x8x128xf32>
      %c0_16 = arith.constant 0 : index
      %c0_17 = arith.constant 0 : index
      %c0_18 = arith.constant 0 : index
      %42 = vector.load %arg4[%c0_16, %c0_17, %c0_18] : memref<1x8x128xf32, #tpu.memory_space<vmem>>, vector<1x8x128xf32>
      tpu.vector_store %arg4[%c0_16, %c0_17, %c0_18], %41 {strides = array<i32>} : memref<1x8x128xf32, #tpu.memory_space<vmem>>, vector<1x8x128xf32>,
    } else {
    }
    return
  }
  func.func @transform_0(%arg0: i32, %arg1: i32) -> (i32, i32) {
    %c2_i32 = arith.constant 2 : i32
    %0 = arith.muli %arg0, %c2_i32 : i32
    %1 = arith.addi %0, %arg1 : i32
    %c3_i32 = arith.constant 3 : i32
    %2 = arith.minsi %1, %c3_i32 : i32
    %c0_i32 = arith.constant 0 : i32
    %c0_i32_0 = arith.constant 0 : i32
    return %2, %c0_i32 : i32, i32
  }
  func.func @transform_1(%arg0: i32, %arg1: i32) -> (i32, i32) {
    %c2_i32 = arith.constant 2 : i32
    %0 = arith.muli %arg0, %c2_i32 : i32
    %1 = arith.addi %0, %arg1 : i32
    %c3_i32 = arith.constant 3 : i32
    %2 = arith.minsi %1, %c3_i32 : i32
    %c0_i32 = arith.constant 0 : i32
    %c0_i32_0 = arith.constant 0 : i32
    return %2, %c0_i32 : i32, i32
  }
  func.func @transform_2(%arg0: i32, %arg1: i32) -> (i32, i32, i32) {
    %c0_i32 = arith.constant 0 : i32
    %c0_i32_0 = arith.constant 0 : i32
    %c0_i32_1 = arith.constant 0 : i32
    return %arg0, %c0_i32, %c0_i32_0 : i32, i32, i32
  }
}

</mosaic_0001>

<llo_original>
// kernel: tpu_custom_call.1
$region0: #{tpu_custom_call.1}
  #allocation0 [shape = 'u32[]', space=smem, size = 0x4, offset = 0x4, fixed_abs, tag = 'smem constant byte address 0x4 - core index']
  #allocation1 [shape = 'u32[72,128]{1,0:T(1,128)}', space=vmem, size = 0x9000, scoped, tag = 'internal scratch']
  #allocation2 [shape = 'f32[1,128]{1,0:T(1,128)}', space=vmem, size = 0x200, scoped, tag = 'scratch operand']
  %s0 = inlined_call_operand.hbm [shape: f32[200,128], index: 0, kind: input, shape index: {}]
  %s1 = inlined_call_operand.hbm [shape: f32[200,128], index: 1, kind: input, shape index: {}]
  %s2 = inlined_call_operand.hbm [shape: f32[2,8,128], index: 2, kind: output, shape index: {}]
  %s3 = sld [smem:[#allocation0]]
  $region65: #{tpu_custom_call.1} parent=0
    _
  %s5 = ssub.s32 1, %s3
  %s6 = scalar_select 0, %s5, %s3
  $region1: #{tpu_custom_call.1} parent=0
    #allocation3 [shape = 'u8[65536]{0}', space=vmem, size = 0x10000, scoped, tag = 'input window, operand 0']
    #allocation4 [shape = 's32[2]{0}', space=sflag, size = 0x8, scoped, tag = 'scoped memory for tpu_custom_call.1']
    #allocation5 [shape = 's32[2]{0}', space=sflag, size = 0x8, scoped, tag = 'scoped memory for tpu_custom_call.1']
    #allocation6 [shape = 'u8[65536]{0}', space=vmem, size = 0x10000, scoped, tag = 'input window, operand 1']
    #allocation7 [shape = 's32[2]{0}', space=sflag, size = 0x8, scoped, tag = 'scoped memory for tpu_custom_call.1']
    #allocation8 [shape = 'u8[8192]{0}', space=vmem, size = 0x2000, scoped, tag = 'output window, operand 0']
    %7 = vsyncpa [#allocation4], 0
    %s8 = scalar_lea.sflag [#allocation4], 1
    %9 = vsyncpa %s8, 0
    %10 = vsyncpa [#allocation7], 0
    %s11 = scalar_lea.sflag [#allocation7], 1
    %12 = vsyncpa %s11, 0
    %13 = vsyncpa [#allocation5], 0
    %s14 = scalar_lea.sflag [#allocation5], 1
    %15 = vsyncpa %s14, 0
    loop: start=0, step=1, limit=6
    $region2: #{tpu_custom_call.1} parent=1 // loop_pre_header
      _
    $region3: #{tpu_custom_call.1} parent=1 // loop_header
      %s17 = sphi 0, %s21
      %p18 = scmp.ge.s32.totalorder %s17, 6
      %s24 = sphi 0, %s36
      %s25 = sphi 0, %s32
      %s26 = sphi 0, %s24
      %s27 = sphi 0, %s25
      %s28 = sphi 0, %s26
      %s29 = sphi 0, %s27
      %s47 = sphi 0, %s49
      %s50 = sphi 0, %s47
      %s51 = sphi 0, %s50
      %s67 = sphi 0, %s51
      %s81 = sphi 0, %s83
      %s84 = sphi 0, %s81
      %s85 = sphi 0, %s84
      %s101 = sphi 0, %s85
      %s107 = sphi 0, %s109
      %s110 = sphi 0, %s107
      %s111 = sphi 0, %s110
      %s127 = sphi 0, %s111
    $region4: #{tpu_custom_call.1} parent=1 // loop_header_branch
      %20 = sbr.rel (%p18) target = $region8
    $region5: #{tpu_custom_call.1} parent=1 // loop_body
      %s22 = ssub.s32 %s17, 1
      %s23 = ssub.s32 %s17, 2
      %s30 = sadd.s32 1, %s25
      %p31 = scmp.ge.s32.totalorder %s30, 2
      %s32 = scalar_select %p31, 0, %s30
      %s33 = sadd.s32 1, %s24
      %s34 = scalar_select %p31, %s33, %s24
      %p35 = scmp.ge.s32.totalorder %s34, 2
      %s36 = scalar_select %p35, 0, %s34
      %s37 = smul.u32 %s24, 2
      %s38 = sadd.s32 %s37, %s25
      %p39 = scmp.lt.s32.totalorder %s38, 3
      %s40 = scalar_select %p39, %s38, 3
      %s41 = smul.u32 %s36, 2
      %s42 = sadd.s32 %s41, %s32
      %p43 = scmp.lt.s32.totalorder %s42, 3
      %s44 = scalar_select %p43, %s42, 3
      %s45 = ssub.s32 %s40, %s44
      %p46 = scmp.eq.s32.totalorder %s45, 0
      %s48 = sadd.s32 %s47, 1
      %s49 = scalar_select %p46, %s47, %s48
      %p52 = pneg %p46
      %p53 = scmp.eq.s32.totalorder %s17, 3
      %p54 = por %p52, %p53
      %p55 = scmp.ne.s32.totalorder %s47, %s50
      %p56 = scmp.eq.s32.totalorder %s17, 0
      %p57 = por %p55, %p56
      %p58 = scmp.ne.s32.totalorder %s47, %s50
      %p59 = scmp.eq.s32.totalorder %s22, 3
      %p60 = por %p58, %p59
      %p61 = scmp.ne.s32.totalorder %s50, %s51
      %p62 = scmp.eq.s32.totalorder %s22, 0
      %p63 = por %p61, %p62
      %p64 = scmp.ne.s32.totalorder %s50, %s51
      %p65 = scmp.eq.s32.totalorder %s23, 3
      %p66 = por %p64, %p65
      %p68 = scmp.ne.s32.totalorder %s51, %s67
      %p69 = scmp.eq.s32.totalorder %s23, 0
      %p70 = por %p68, %p69
      %s71 = smul.u32 %s24, 2
      %s72 = sadd.s32 %s71, %s25
      %p73 = scmp.lt.s32.totalorder %s72, 3
      %s74 = scalar_select %p73, %s72, 3
      %s75 = smul.u32 %s36, 2
      %s76 = sadd.s32 %s75, %s32
      %p77 = scmp.lt.s32.totalorder %s76, 3
      %s78 = scalar_select %p77, %s76, 3
      %s79 = ssub.s32 %s74, %s78
      %p80 = scmp.eq.s32.totalorder %s79, 0
      %s82 = sadd.s32 %s81, 1
      %s83 = scalar_select %p80, %s81, %s82
      %p86 = pneg %p80
      %p87 = scmp.eq.s32.totalorder %s17, 3
      %p88 = por %p86, %p87
      %p89 = scmp.ne.s32.totalorder %s81, %s84
      %p90 = scmp.eq.s32.totalorder %s17, 0
      %p91 = por %p89, %p90
      %p92 = scmp.ne.s32.totalorder %s81, %s84
      %p93 = scmp.eq.s32.totalorder %s22, 3
      %p94 = por %p92, %p93
      %p95 = scmp.ne.s32.totalorder %s84, %s85
      %p96 = scmp.eq.s32.totalorder %s22, 0
      %p97 = por %p95, %p96
      %p98 = scmp.ne.s32.totalorder %s84, %s85
      %p99 = scmp.eq.s32.totalorder %s23, 3
      %p100 = por %p98, %p99
      %p102 = scmp.ne.s32.totalorder %s85, %s101
      %p103 = scmp.eq.s32.totalorder %s23, 0
      %p104 = por %p102, %p103
      %s105 = ssub.s32 %s24, %s36
      %p106 = scmp.eq.s32.totalorder %s105, 0
      %s108 = sadd.s32 %s107, 1
      %s109 = scalar_select %p106, %s107, %s108
      %p112 = pneg %p106
      %p113 = scmp.eq.s32.totalorder %s17, 3
      %p114 = por %p112, %p113
      %p115 = scmp.ne.s32.totalorder %s107, %s110
      %p116 = scmp.eq.s32.totalorder %s17, 0
      %p117 = por %p115, %p116
      %p118 = scmp.ne.s32.totalorder %s107, %s110
      %p119 = scmp.eq.s32.totalorder %s22, 3
      %p120 = por %p118, %p119
      %p121 = scmp.ne.s32.totalorder %s110, %s111
      %p122 = scmp.eq.s32.totalorder %s22, 0
      %p123 = por %p121, %p122
      %p124 = scmp.ne.s32.totalorder %s110, %s111
      %p125 = scmp.eq.s32.totalorder %s23, 3
      %p126 = por %p124, %p125
      %p128 = scmp.ne.s32.totalorder %s111, %s127
      %p129 = scmp.eq.s32.totalorder %s23, 0
      %p130 = por %p128, %p129
      %p131 = scmp.le.s32.totalorder 1, %s17
      %p132 = scmp.lt.s32.totalorder %s17, 5
      %p133 = pnand %p131, %p132
      %p134 = pneg %p133
      // Predicated region
      $region9: #{tpu_custom_call.1} parent=5 // pred_check
        _
      $region10: #{tpu_custom_call.1} parent=5 // pred_check_branch
        %136 = sbr.rel (%p133) target = $region12
      $region11: #{tpu_custom_call.1} parent=5 // pred_region
        %s137 = ssub.s32 %s17, 1
      $region12: #{tpu_custom_call.1} parent=5 // pred_fallthru
        _
      %p138 = scmp.lt.s32.totalorder %s17, 4
      // Predicated region
      $region13: #{tpu_custom_call.1} parent=5 // pred_check
        %p139 = pneg %p138
      $region14: #{tpu_custom_call.1} parent=5 // pred_check_branch
        %141 = sbr.rel (%p139) target = $region16
      $region15: #{tpu_custom_call.1} parent=5 // pred_region
        // Predicated region
        $region17: #{tpu_custom_call.1} parent=15 // pred_check
          %p142 = pneg %p57
        $region18: #{tpu_custom_call.1} parent=15 // pred_check_branch
          %144 = sbr.rel (%p142) target = $region20
        $region19: #{tpu_custom_call.1} parent=15 // pred_region
          %s145 = sand.u32 %s47, 1
          %s146 = scalar_lea.sflag [#allocation4], %s145
          %s147 = sand.u32 %s47, 1
          %s148 = smul.addr %s147, 64
          %s149 = scalar_lea.vmem [#allocation3], %s148
          %s150 = smul.u32 %s24, 2
          %s151 = sadd.s32 %s150, %s25
          %p152 = scmp.lt.s32.totalorder %s151, 3
          %s153 = scalar_select %p152, %s151, 3
          %s154 = smul.u32 8, %s153
          %s155 = ssub.s32 25, %s154
          %p156 = scmp.lt.s32.totalorder %s155, 8
          %s157 = scalar_select %p156, %s155, 8
          %s158 = smul.u32 8, %s157
          %s159 = ssub.s32 64, %s158
          %s160 = sshll.u32 %s159, 4
          %161 = vsyncadd %s146, %s160
          %p162 = scmp.ne.s32.totalorder 0, %s158
          %s163 = smul.addr %s154, 8
          %s164 = scalar_lea.hbm %s0, %s163
          %s165 = smul.u32 8, %s157
          %s166 = sshll.u32 %s164, 4
          %s167 = int_to_ptr.hbm [resolvable:$true] %s166
          %s168 = sshll.u32 %s149, 4
          %s169 = int_to_ptr.vmem [resolvable:$true] %s168
          %s170 = sshll.u32 %s165, 4
          %174 = dma.hbm_to_vmem [thread:$0]  (%p162), %s167, %s170, %s169, %s146, 128, 128, 8
        $region20: #{tpu_custom_call.1} parent=15 // pred_fallthru
          _
        // Predicated region
        $region21: #{tpu_custom_call.1} parent=15 // pred_check
          %p175 = pneg %p91
        $region22: #{tpu_custom_call.1} parent=15 // pred_check_branch
          %177 = sbr.rel (%p175) target = $region24
        $region23: #{tpu_custom_call.1} parent=15 // pred_region
          %s178 = sand.u32 %s81, 1
          %s179 = scalar_lea.sflag [#allocation7], %s178
          %s180 = sand.u32 %s81, 1
          %s181 = smul.addr %s180, 64
          %s182 = scalar_lea.vmem [#allocation6], %s181
          %s183 = smul.u32 %s24, 2
          %s184 = sadd.s32 %s183, %s25
          %p185 = scmp.lt.s32.totalorder %s184, 3
          %s186 = scalar_select %p185, %s184, 3
          %s187 = smul.u32 8, %s186
          %s188 = ssub.s32 25, %s187
          %p189 = scmp.lt.s32.totalorder %s188, 8
          %s190 = scalar_select %p189, %s188, 8
          %s191 = smul.u32 8, %s190
          %s192 = ssub.s32 64, %s191
          %s193 = sshll.u32 %s192, 4
          %194 = vsyncadd %s179, %s193
          %p195 = scmp.ne.s32.totalorder 0, %s191
          %s196 = smul.addr %s187, 8
          %s197 = scalar_lea.hbm %s1, %s196
          %s198 = smul.u32 8, %s190
          %s199 = sshll.u32 %s197, 4
          %s200 = int_to_ptr.hbm [resolvable:$true] %s199
          %s201 = sshll.u32 %s182, 4
          %s202 = int_to_ptr.vmem [resolvable:$true] %s201
          %s203 = sshll.u32 %s198, 4
          %207 = dma.hbm_to_vmem [thread:$0]  (%p195), %s200, %s203, %s202, %s179, 128, 128, 8
        $region24: #{tpu_custom_call.1} parent=15 // pred_fallthru
          _
      $region16: #{tpu_custom_call.1} parent=5 // pred_fallthru
        _
      %p208 = scmp.le.s32.totalorder 1, %s17
      %p209 = scmp.lt.s32.totalorder %s17, 5
      %p210 = pnand %p208, %p209
      %p211 = pneg %p210
      // Predicated region
      $region25: #{tpu_custom_call.1} parent=5 // pred_check
        _
      $region26: #{tpu_custom_call.1} parent=5 // pred_check_branch
        %213 = sbr.rel (%p210) target = $region28
      $region27: #{tpu_custom_call.1} parent=5 // pred_region
        %s214 = ssub.s32 %s17, 1
        %s215 = sand.u32 %s50, 1
        %s216 = scalar_lea.sflag [#allocation4], %s215
        %s217 = sand.u32 %s50, 1
        %s218 = smul.addr %s217, 64
        %s219 = scalar_lea.vmem [#allocation3], %s218
        // Predicated region
        $region29: #{tpu_custom_call.1} parent=27 // pred_check
          %p220 = pneg %p63
        $region30: #{tpu_custom_call.1} parent=27 // pred_check_branch
          %222 = sbr.rel (%p220) target = $region32
        $region31: #{tpu_custom_call.1} parent=27 // pred_region
          %224 = dma.done %s216, 1024
        $region32: #{tpu_custom_call.1} parent=27 // pred_fallthru
          _
        %s225 = sand.u32 %s84, 1
        %s226 = scalar_lea.sflag [#allocation7], %s225
        %s227 = sand.u32 %s84, 1
        %s228 = smul.addr %s227, 64
        %s229 = scalar_lea.vmem [#allocation6], %s228
        // Predicated region
        $region33: #{tpu_custom_call.1} parent=27 // pred_check
          %p230 = pneg %p97
        $region34: #{tpu_custom_call.1} parent=27 // pred_check_branch
          %232 = sbr.rel (%p230) target = $region36
        $region35: #{tpu_custom_call.1} parent=27 // pred_region
          %234 = dma.done %s226, 1024
        $region36: #{tpu_custom_call.1} parent=27 // pred_fallthru
          _
        %s235 = sand.u32 %s50, 1
        %s236 = scalar_lea.sflag [#allocation4], %s235
        %s237 = sand.u32 %s50, 1
        %s238 = smul.addr %s237, 64
        %s239 = scalar_lea.vmem [#allocation3], %s238
        %p240 = pneg %p63
        %p241 = pneg %p60
        %s242 = sand.u32 %s84, 1
        %s243 = scalar_lea.sflag [#allocation7], %s242
        %s244 = sand.u32 %s84, 1
        %s245 = smul.addr %s244, 64
        %s246 = scalar_lea.vmem [#allocation6], %s245
        %p247 = pneg %p97
        %p248 = pneg %p94
        %p249 = pneg %p123
        %p250 = pneg %p120
        %s251 = sand.u32 %s110, 1
        %s252 = scalar_lea.sflag [#allocation5], %s251
        %s253 = sand.u32 %s110, 1
        %s254 = smul.addr %s253, 8
        %s255 = scalar_lea.vmem [#allocation8], %s254
        %s256 = smul.u32 %s26, 2
        %s257 = sadd.s32 %s256, %s27
        %p258 = scmp.lt.s32.totalorder %s257, 3
        %s259 = scalar_select %p258, %s257, 3
        %s260 = smul.u32 8, %s259
        %s261 = ssub.s32 25, %s260
        %p262 = scmp.lt.s32.totalorder %s261, 8
        %s263 = scalar_select %p262, %s261, 8
        %s264 = smul.u32 8, %s263
        %s265 = smul.u32 %s26, 2
        %s266 = sadd.s32 %s265, %s27
        %p267 = scmp.lt.s32.totalorder %s266, 3
        %s268 = scalar_select %p267, %s266, 3
        %s269 = smul.u32 8, %s268
        %s270 = ssub.s32 25, %s269
        %p271 = scmp.lt.s32.totalorder %s270, 8
        %s272 = scalar_select %p271, %s270, 8
        %s273 = smul.u32 8, %s272
        %s274 = smul.u32 %s26, 2
        %s275 = sadd.s32 %s274, %s27
        %p276 = scmp.eq.s32.totalorder %s27, 0
        // Predicated region
        $region37: #{tpu_custom_call.1} parent=27 // pred_check
          %p277 = pneg %p276
        $region38: #{tpu_custom_call.1} parent=27 // pred_check_branch
          %279 = sbr.rel (%p277) target = $region40
        $region39: #{tpu_custom_call.1} parent=27 // pred_region
          %280 = vst [vmem:[#allocation2] sm:$0x1] 0.0
        $region40: #{tpu_custom_call.1} parent=27 // pred_fallthru
          _
        %v281 = vld [vmem:[%s219] sm:$0xff]
        %v282 = vld [vmem:[%s219 + $0x8] sm:$0xff]
        %v283 = vld [vmem:[%s219 + $0x10] sm:$0xff]
        %v284 = vld [vmem:[%s219 + $0x18] sm:$0xff]
        %v285 = vld [vmem:[%s219 + $0x20] sm:$0xff]
        %v286 = vld [vmem:[%s219 + $0x28] sm:$0xff]
        %v287 = vld [vmem:[%s219 + $0x30] sm:$0xff]
        %v288 = vld [vmem:[%s219 + $0x38] sm:$0xff]
        %v289 = vld [vmem:[%s229] sm:$0xff]
        %v290 = vld [vmem:[%s229 + $0x8] sm:$0xff]
        %v291 = vld [vmem:[%s229 + $0x10] sm:$0xff]
        %v292 = vld [vmem:[%s229 + $0x18] sm:$0xff]
        %v293 = vld [vmem:[%s229 + $0x20] sm:$0xff]
        %v294 = vld [vmem:[%s229 + $0x28] sm:$0xff]
        %v295 = vld [vmem:[%s229 + $0x30] sm:$0xff]
        %v296 = vld [vmem:[%s229 + $0x38] sm:$0xff]
        %v297 = vand.u32 2147483647, %v281
        %v298 = vand.u32 2147483647, %v282
        %v299 = vand.u32 2147483647, %v283
        %v300 = vand.u32 2147483647, %v284
        %v301 = vand.u32 2147483647, %v285
        %v302 = vand.u32 2147483647, %v286
        %v303 = vand.u32 2147483647, %v287
        %v304 = vand.u32 2147483647, %v288
        %v305 = vsub.f32 0.0, %v297
        %v306 = vsub.f32 0.0, %v298
        %v307 = vsub.f32 0.0, %v299
        %v308 = vsub.f32 0.0, %v300
        %v309 = vsub.f32 0.0, %v301
        %v310 = vsub.f32 0.0, %v302
        %v311 = vsub.f32 0.0, %v303
        %v312 = vsub.f32 0.0, %v304
        %v313 = vmul.f32 %v305, 1.442695
        %v314 = vpow.pop %v313
        %v315 = vmul.f32 %v306, 1.442695
        %v316 = vpow.pop %v315
        %v317 = vmul.f32 %v307, 1.442695
        %v318 = vpow.pop %v317
        %v319 = vmul.f32 %v308, 1.442695
        %v320 = vpow.pop %v319
        %v321 = vmul.f32 %v309, 1.442695
        %v322 = vpow.pop %v321
        %v323 = vmul.f32 %v310, 1.442695
        %v324 = vpow.pop %v323
        %v325 = vmul.f32 %v311, 1.442695
        %v326 = vpow.pop %v325
        %v327 = vmul.f32 %v312, 1.442695
        %v328 = vpow.pop %v327
        %v329 = vmax.f32 %v281, 0.0
        %v330 = vmax.f32 %v282, 0.0
        %v331 = vmax.f32 %v283, 0.0
        %v332 = vmax.f32 %v284, 0.0
        %v333 = vmax.f32 %v285, 0.0
        %v334 = vmax.f32 %v286, 0.0
        %v335 = vmax.f32 %v287, 0.0
        %v336 = vmax.f32 %v288, 0.0
        %v337 = vmul.f32 %v281, %v289
        %v338 = vmul.f32 %v282, %v290
        %v339 = vmul.f32 %v283, %v291
        %v340 = vmul.f32 %v284, %v292
        %v341 = vmul.f32 %v285, %v293
        %v342 = vmul.f32 %v286, %v294
        %v343 = vmul.f32 %v287, %v295
        %v344 = vmul.f32 %v288, %v296
        %v345 = vsub.f32 %v329, %v337
        %v346 = vsub.f32 %v330, %v338
        %v347 = vsub.f32 %v331, %v339
        %v348 = vsub.f32 %v332, %v340
        %v349 = vsub.f32 %v333, %v341
        %v350 = vsub.f32 %v334, %v342
        %v351 = vsub.f32 %v335, %v343
        %v352 = vsub.f32 %v336, %v344
        %v353 = vadd.f32 %v314, 1.0
        %v354 = vlog2.pop %v353
        %v355 = vmul.f32 %v354, 0.6931472
        %v356 = vmul.f32 -0.5, %v314
        %v357 = vadd.f32 %v356, 1.0
        %v358 = vmul.f32 %v357, %v314
        %v359 = vand.u32 2147483647, %v314
        %vm360 = vcmp.lt.f32.partialorder %v359, 0.0004427343
        %v361 = vsel %vm360, %v358, %v355
        %v362 = vadd.f32 %v316, 1.0
        %v363 = vlog2.pop %v362
        %v364 = vmul.f32 %v363, 0.6931472
        %v365 = vmul.f32 -0.5, %v316
        %v366 = vadd.f32 %v365, 1.0
        %v367 = vmul.f32 %v366, %v316
        %v368 = vand.u32 2147483647, %v316
        %vm369 = vcmp.lt.f32.partialorder %v368, 0.0004427343
        %v370 = vsel %vm369, %v367, %v364
        %v371 = vadd.f32 %v318, 1.0
        %v372 = vlog2.pop %v371
        %v373 = vmul.f32 %v372, 0.6931472
        %v374 = vmul.f32 -0.5, %v318
        %v375 = vadd.f32 %v374, 1.0
        %v376 = vmul.f32 %v375, %v318
        %v377 = vand.u32 2147483647, %v318
        %vm378 = vcmp.lt.f32.partialorder %v377, 0.0004427343
        %v379 = vsel %vm378, %v376, %v373
        %v380 = vadd.f32 %v320, 1.0
        %v381 = vlog2.pop %v380
        %v382 = vmul.f32 %v381, 0.6931472
        %v383 = vmul.f32 -0.5, %v320
        %v384 = vadd.f32 %v383, 1.0
        %v385 = vmul.f32 %v384, %v320
        %v386 = vand.u32 2147483647, %v320
        %vm387 = vcmp.lt.f32.partialorder %v386, 0.0004427343
        %v388 = vsel %vm387, %v385, %v382
        %v389 = vadd.f32 %v322, 1.0
        %v390 = vlog2.pop %v389
        %v391 = vmul.f32 %v390, 0.6931472
        %v392 = vmul.f32 -0.5, %v322
        %v393 = vadd.f32 %v392, 1.0
        %v394 = vmul.f32 %v393, %v322
        %v395 = vand.u32 2147483647, %v322
        %vm396 = vcmp.lt.f32.partialorder %v395, 0.0004427343
        %v397 = vsel %vm396, %v394, %v391
        %v398 = vadd.f32 %v324, 1.0
        %v399 = vlog2.pop %v398
        %v400 = vmul.f32 %v399, 0.6931472
        %v401 = vmul.f32 -0.5, %v324
        %v402 = vadd.f32 %v401, 1.0
        %v403 = vmul.f32 %v402, %v324
        %v404 = vand.u32 2147483647, %v324
        %vm405 = vcmp.lt.f32.partialorder %v404, 0.0004427343
        %v406 = vsel %vm405, %v403, %v400
        %v407 = vadd.f32 %v326, 1.0
        %v408 = vlog2.pop %v407
        %v409 = vmul.f32 %v408, 0.6931472
        %v410 = vmul.f32 -0.5, %v326
        %v411 = vadd.f32 %v410, 1.0
        %v412 = vmul.f32 %v411, %v326
        %v413 = vand.u32 2147483647, %v326
        %vm414 = vcmp.lt.f32.partialorder %v413, 0.0004427343
        %v415 = vsel %vm414, %v412, %v409
        %v416 = vadd.f32 %v328, 1.0
        %v417 = vlog2.pop %v416
        %v418 = vmul.f32 %v417, 0.6931472
        %v419 = vmul.f32 -0.5, %v328
        %v420 = vadd.f32 %v419, 1.0
        %v421 = vmul.f32 %v420, %v328
        %v422 = vand.u32 2147483647, %v328
        %vm423 = vcmp.lt.f32.partialorder %v422, 0.0004427343
        %v424 = vsel %vm423, %v421, %v418
        %v425 = vadd.f32 %v345, %v361
        %v426 = vadd.f32 %v346, %v370
        %v427 = vadd.f32 %v347, %v379
        %v428 = vadd.f32 %v348, %v388
        %v429 = vadd.f32 %v349, %v397
        %v430 = vadd.f32 %v350, %v406
        %v431 = vadd.f32 %v351, %v415
        %v432 = vadd.f32 %v352, %v424
        %v433 = vsub.f32 0.0, %v425
        %v434 = vsub.f32 0.0, %v426
        %v435 = vsub.f32 0.0, %v427
        %v436 = vsub.f32 0.0, %v428
        %v437 = vsub.f32 0.0, %v429
        %v438 = vsub.f32 0.0, %v430
        %v439 = vsub.f32 0.0, %v431
        %v440 = vsub.f32 0.0, %v432
        %v441 = vmul.f32 %v433, 1.442695
        %v442 = vpow.pop %v441
        %v443 = vmul.f32 %v434, 1.442695
        %v444 = vpow.pop %v443
        %v445 = vmul.f32 %v435, 1.442695
        %v446 = vpow.pop %v445
        %v447 = vmul.f32 %v436, 1.442695
        %v448 = vpow.pop %v447
        %v449 = vmul.f32 %v437, 1.442695
        %v450 = vpow.pop %v449
        %v451 = vmul.f32 %v438, 1.442695
        %v452 = vpow.pop %v451
        %v453 = vmul.f32 %v439, 1.442695
        %v454 = vpow.pop %v453
        %v455 = vmul.f32 %v440, 1.442695
        %v456 = vpow.pop %v455
        %v457 = vsub.f32 1.0, %v442
        %v458 = vsub.f32 1.0, %v444
        %v459 = vsub.f32 1.0, %v446
        %v460 = vsub.f32 1.0, %v448
        %v461 = vsub.f32 1.0, %v450
        %v462 = vsub.f32 1.0, %v452
        %v463 = vsub.f32 1.0, %v454
        %v464 = vsub.f32 1.0, %v456
        %v465 = vmul.f32 %v457, %v457
        %v466 = vmul.f32 %v458, %v458
        %v467 = vmul.f32 %v459, %v459
        %v468 = vmul.f32 %v460, %v460
        %v469 = vmul.f32 %v461, %v461
        %v470 = vmul.f32 %v462, %v462
        %v471 = vmul.f32 %v463, %v463
        %v472 = vmul.f32 %v464, %v464
        %v473 = vmul.f32 %v465, %v425
        %v474 = vmul.f32 %v466, %v426
        %v475 = vmul.f32 %v467, %v427
        %v476 = vmul.f32 %v468, %v428
        %v477 = vmul.f32 %v469, %v429
        %v478 = vmul.f32 %v470, %v430
        %v479 = vmul.f32 %v471, %v431
        %v480 = vmul.f32 %v472, %v432
        %s481 = sadd.s32 %s275, 1
        %s482 = smul.u32 %s481, 64
        %p483 = scmp.le.s32.totalorder %s482, 200
        // Predicated region
        $region41: #{tpu_custom_call.1} parent=27 // pred_check
          %p484 = pneg %p483
        $region42: #{tpu_custom_call.1} parent=27 // pred_check_branch
          %486 = sbr.rel (%p484) target = $region44
        $region43: #{tpu_custom_call.1} parent=27 // pred_region
          %v487 = vld [vmem:[#allocation2] sm:$0x1]
          %v488 = vadd.f32 %v473, %v474
          %v489 = vadd.f32 %v488, %v475
          %v490 = vadd.f32 %v489, %v476
          %v491 = vadd.f32 %v490, %v477
          %v492 = vadd.f32 %v491, %v478
          %v493 = vadd.f32 %v492, %v479
          %v494 = vadd.f32 %v493, %v480
          %v495 = vrot.slane %v494, 4
          %v496 = vadd.f32 %v494, %v495
          %v497 = vrot.slane %v496, 2
          %v498 = vadd.f32 %v496, %v497
          %v499 = vrot.slane %v498, 1
          %v500 = vadd.f32 %v498, %v499
          %v501 = vadd.f32 %v487, %v500
          %502 = vst [vmem:[#allocation2] sm:$0x1] %v501
        $region44: #{tpu_custom_call.1} parent=27 // pred_fallthru
          _
        %p503 = scmp.gt.s32.totalorder %s482, 200
        // Predicated region
        $region45: #{tpu_custom_call.1} parent=27 // pred_check
          %p504 = pneg %p503
        $region46: #{tpu_custom_call.1} parent=27 // pred_check_branch
          %506 = sbr.rel (%p504) target = $region48
        $region47: #{tpu_custom_call.1} parent=27 // pred_region
          %s507 = smul.u32 %s275, 64
          %v508 = vlaneseq
          %v509 = vshrl.u32 %v508, 7
          %v510 = vadd.s32 %v509, 8
          %v511 = vadd.s32 %v509, 16
          %v512 = vadd.s32 %v509, 24
          %v513 = vadd.s32 %v509, 32
          %v514 = vadd.s32 %v509, 40
          %v515 = vadd.s32 %v509, 48
          %v516 = vadd.s32 %v509, 56
          %v517 = vstv %s507
          %v518 = vadd.s32 %v517, %v509
          %v519 = vadd.s32 %v517, %v510
          %v520 = vadd.s32 %v517, %v511
          %v521 = vadd.s32 %v517, %v512
          %v522 = vadd.s32 %v517, %v513
          %v523 = vadd.s32 %v517, %v514
          %v524 = vadd.s32 %v517, %v515
          %v525 = vadd.s32 %v517, %v516
          %vm526 = vcmp.lt.s32.totalorder %v518, 200
          %vm527 = vcmp.lt.s32.totalorder %v519, 200
          %vm528 = vcmp.lt.s32.totalorder %v520, 200
          %vm529 = vcmp.lt.s32.totalorder %v521, 200
          %vm530 = vcmp.lt.s32.totalorder %v522, 200
          %vm531 = vcmp.lt.s32.totalorder %v523, 200
          %vm532 = vcmp.lt.s32.totalorder %v524, 200
          %vm533 = vcmp.lt.s32.totalorder %v525, 200
          %v534 = vsel %vm526, %v473, 0.0
          %v535 = vsel %vm527, %v474, 0.0
          %v536 = vsel %vm528, %v475, 0.0
          %v537 = vsel %vm529, %v476, 0.0
          %v538 = vsel %vm530, %v477, 0.0
          %v539 = vsel %vm531, %v478, 0.0
          %v540 = vsel %vm532, %v479, 0.0
          %v541 = vsel %vm533, %v480, 0.0
          %v542 = vld [vmem:[#allocation2] sm:$0x1]
          %v543 = vadd.f32 %v534, %v535
          %v544 = vadd.f32 %v543, %v536
          %v545 = vadd.f32 %v544, %v537
          %v546 = vadd.f32 %v545, %v538
          %v547 = vadd.f32 %v546, %v539
          %v548 = vadd.f32 %v547, %v540
          %v549 = vadd.f32 %v548, %v541
          %v550 = vrot.slane %v549, 4
          %v551 = vadd.f32 %v549, %v550
          %v552 = vrot.slane %v551, 2
          %v553 = vadd.f32 %v551, %v552
          %v554 = vrot.slane %v553, 1
          %v555 = vadd.f32 %v553, %v554
          %v556 = vadd.f32 %v542, %v555
          %557 = vst [vmem:[#allocation2] sm:$0x1] %v556
        $region48: #{tpu_custom_call.1} parent=27 // pred_fallthru
          _
        %p558 = scmp.eq.s32.totalorder %s27, 1
        // Predicated region
        $region49: #{tpu_custom_call.1} parent=27 // pred_check
          %p559 = pneg %p558
        $region50: #{tpu_custom_call.1} parent=27 // pred_check_branch
          %561 = sbr.rel (%p559) target = $region52
        $region51: #{tpu_custom_call.1} parent=27 // pred_region
          %v562 = vld [vmem:[#allocation2] sm:$0x1]
          %vm563 = vcmask 1040384
          %v564 = vsel %vm563, %v562, 0.0
          %565 = vadd.xlane.f32.xlu0 %v564
          %v566 = vpop.xlane.xlu0 %565
          %v567 = vrot.slane %v566, 4
          %v568 = vadd.f32 %v566, %v567
          %v569 = vrot.slane %v568, 2
          %v570 = vadd.f32 %v568, %v569
          %v571 = vrot.slane %v570, 1
          %v572 = vadd.f32 %v570, %v571
          %s573 = vtos %v572
          %s574 = smul.f32 %s573, 1.171875e-05
          %v575 = vstv %s574
          %576 = vst [vmem:[%s255] sm:$0xff] %v575
        $region52: #{tpu_custom_call.1} parent=27 // pred_fallthru
          _
        %s577 = sand.u32 %s110, 1
        %s578 = scalar_lea.sflag [#allocation5], %s577
        %s579 = sand.u32 %s110, 1
        %s580 = smul.addr %s579, 8
        %s581 = scalar_lea.vmem [#allocation8], %s580
        // Predicated region
        $region53: #{tpu_custom_call.1} parent=27 // pred_check
          %p582 = pneg %p120
        $region54: #{tpu_custom_call.1} parent=27 // pred_check_branch
          %584 = sbr.rel (%p582) target = $region56
        $region55: #{tpu_custom_call.1} parent=27 // pred_region
          %586 = vsyncadd %s578, 0
          %s587 = smul.addr %s26, 8
          %s588 = scalar_lea.hbm %s2, %s587
          %s590 = sshll.u32 %s581, 4
          %s591 = int_to_ptr.vmem [resolvable:$true] %s590
          %s592 = sshll.u32 %s588, 4
          %s593 = int_to_ptr.hbm [resolvable:$true] %s592
          %595 = dma.vmem_to_hbm [thread:$0]  %s591, 128, %s593, %s578
        $region56: #{tpu_custom_call.1} parent=27 // pred_fallthru
          _
      $region28: #{tpu_custom_call.1} parent=5 // pred_fallthru
        _
      %p596 = scmp.le.s32.totalorder 2, %s17
      // Predicated region
      $region57: #{tpu_custom_call.1} parent=5 // pred_check
        %p597 = pneg %p596
      $region58: #{tpu_custom_call.1} parent=5 // pred_check_branch
        %599 = sbr.rel (%p597) target = $region60
      $region59: #{tpu_custom_call.1} parent=5 // pred_region
        %s600 = ssub.s32 %s17, 2
        // Predicated region
        $region61: #{tpu_custom_call.1} parent=59 // pred_check
          %p601 = pneg %p126
        $region62: #{tpu_custom_call.1} parent=59 // pred_check_branch
          %603 = sbr.rel (%p601) target = $region64
        $region63: #{tpu_custom_call.1} parent=59 // pred_region
          %s604 = sand.u32 %s111, 1
          %s605 = scalar_lea.sflag [#allocation5], %s604
          %s606 = sand.u32 %s111, 1
          %s607 = smul.addr %s606, 8
          %s608 = scalar_lea.vmem [#allocation8], %s607
          %610 = dma.done %s605, 128
        $region64: #{tpu_custom_call.1} parent=59 // pred_fallthru
          _
      $region60: #{tpu_custom_call.1} parent=5 // pred_fallthru
        _
    $region6: #{tpu_custom_call.1} parent=1 // loop_footer
      %s21 = sadd.s32 1, %s17
    $region7: #{tpu_custom_call.1} parent=1 // loop_footer_branch
      %16 = sbr.rel target = $region3
    $region8: #{tpu_custom_call.1} parent=1 // loop_exit
      _
    %611 = vsyncpa [#allocation4], 1
    %s612 = scalar_lea.sflag [#allocation4], 1
    %613 = vsyncpa %s612, 1
    %614 = vsyncpa [#allocation7], 1
    %s615 = scalar_lea.sflag [#allocation7], 1
    %616 = vsyncpa %s615, 1
    %617 = vsyncpa [#allocation5], 1
    %s618 = scalar_lea.sflag [#allocation5], 1
    %619 = vsyncpa %s618, 1

</llo_original>
